<compile_context>
chip_gen: v6e
topology: v6e:2x2x1
jax: 0.10.0
libtpu: 0.0.40
codegen_flags: <defaults>
</compile_context>

<pallas_src>
import functools

import jax
import jax.numpy as jnp
import numpy as np
from jax.experimental import pallas as pl
from jax.experimental.pallas import tpu as pltpu


def _int_pow(base, n):
    """base ** n for a small static non-negative integer n (VPU multiplies)."""
    if n == 0:
        return jnp.ones_like(base)
    result = None
    acc = base
    while n:
        if n & 1:
            result = acc if result is None else result * acc
        n >>= 1
        if n:
            acc = acc * acc
    return result


def _asl_kernel(x_ref, t_ref, o_ref, *, margin, gamma_neg, gamma_pos, clip,
                eps, use_clip, use_focal, int_gammas, disjoint_masks,
                reduce_rows, col_tile, valid_cols, mask_cols):
    """Asymmetric focal BCE on one (tb, tl) tile; optional per-row reduction."""
    x = x_ref[...].astype(jnp.float32)
    t = t_ref[...].astype(jnp.float32)

    pos = t > margin
    neg = t < -margin

    # sigmoid (the exp rides the EUP slot)
    s = 1.0 / (1.0 + jnp.exp(-x))
    s_neg = 1.0 - s
    if use_clip:
        s_neg = jnp.minimum(s_neg + clip, 1.0)

    if disjoint_masks:
        # margin >= 0 -> pos/neg mutually exclusive: one fused log.
        arg = jnp.where(pos, s, jnp.where(neg, s_neg, 1.0))
        loss = -jnp.log(jnp.maximum(arg, eps))
        if use_focal:
            if int_gammas:
                w_pos = _int_pow(1.0 - s, int(gamma_pos))
                w_neg = _int_pow(1.0 - s_neg, int(gamma_neg))
            else:
                tiny = jnp.float32(1e-30)
                w_pos = jnp.exp(gamma_pos * jnp.log(jnp.maximum(1.0 - s, tiny)))
                w_neg = jnp.exp(gamma_neg * jnp.log(jnp.maximum(1.0 - s_neg, tiny)))
            loss = loss * jnp.where(pos, w_pos, jnp.where(neg, w_neg, 1.0))
    else:
        # margin < 0: masks may overlap -> follow the reference formulation.
        posf = pos.astype(jnp.float32)
        negf = neg.astype(jnp.float32)
        loss = -(posf * jnp.log(jnp.maximum(s, eps))
                 + negf * jnp.log(jnp.maximum(s_neg, eps)))
        if use_focal:
            prob = s * posf + s_neg * negf
            gamma = gamma_pos * posf + gamma_neg * negf
            base = jnp.maximum(1.0 - prob, jnp.float32(1e-30))
            loss = loss * jnp.exp(gamma * jnp.log(base))

    if reduce_rows:
        j = pl.program_id(1)
        if mask_cols:
            col = jax.lax.broadcasted_iota(jnp.int32, loss.shape, 1) + j * col_tile
            loss = jnp.where(col < valid_cols, loss, 0.0)

        @pl.when(j == 0)
        def _():
            o_ref[...] = jnp.zeros_like(o_ref)

        o_ref[...] += jnp.sum(loss, axis=-1, keepdims=True)
    else:
        o_ref[...] = loss


def _round_up8(v):
    return ((v + 7) // 8) * 8


def asymmetric_loss(inp, target, *, margin=0.0, gamma_neg=4.0, gamma_pos=1.0,
                    clip=0.05, eps=1e-8, reduce=None, size_average=None):
    """inp, target: (B, C) in any float dtype. Mirrors AsymmetricLoss.forward."""
    B, C = inp.shape
    assert target.shape == (B, C)
    N = B * C

    # Lane-dense 2-D working view (pure row-major reshape, no data movement).
    if C % 128 == 0:
        R, L = B, C
    elif N % 128 == 0:
        R, L = N // 128, 128
    else:
        R, L = B, C  # TODO(synk): pad C to a multiple of 128 for odd class counts
    x2 = inp.reshape(R, L)
    t2 = target.reshape(R, L)

    # Byte-budget tiling: ~2 MiB (f32) per tile per array, columns tiled when
    # L is large, ragged last blocks handled by Pallas store masking.
    TARGET_ELEMS = 512 * 1024
    tl = L if L <= 2048 else 2048
    tb = _round_up8(max(1, TARGET_ELEMS // tl))
    if R >= 16:
        tb = min(tb, _round_up8(pl.cdiv(R, 2)))   # >=2 row blocks (v7x megacore)
    if tb >= R:
        tb = R
    gb = pl.cdiv(R, tb)
    gc = pl.cdiv(L, tl)
    grid = (gb, gc)

    use_clip = clip is not None and clip > 0
    use_focal = (gamma_neg > 0) or (gamma_pos > 0)
    disjoint = margin >= 0
    int_gammas = (use_focal and disjoint
                  and float(gamma_pos).is_integer() and float(gamma_neg).is_integer()
                  and 0 <= gamma_pos <= 16 and 0 <= gamma_neg <= 16)
    reduce_rows = bool(reduce)
    mask_cols = reduce_rows and (L % tl != 0)

    kernel = functools.partial(
        _asl_kernel,
        margin=float(margin),
        gamma_neg=float(gamma_neg),
        gamma_pos=float(gamma_pos),
        clip=float(clip) if use_clip else 0.0,
        eps=float(eps),
        use_clip=use_clip,
        use_focal=use_focal,
        int_gammas=int_gammas,
        disjoint_masks=disjoint,
        reduce_rows=reduce_rows,
        col_tile=tl,
        valid_cols=L,
        mask_cols=mask_cols,
    )

    in_specs = [pl.BlockSpec((tb, tl), lambda i, j: (i, j)),
                pl.BlockSpec((tb, tl), lambda i, j: (i, j))]

    if reduce_rows:
        out_shape = jax.ShapeDtypeStruct((R, 1), jnp.float32)
        out_spec = pl.BlockSpec((tb, 1), lambda i, j: (i, 0))   # accumulator over j
        dims = ("parallel", "arbitrary")
    else:
        out_shape = jax.ShapeDtypeStruct((R, L), jnp.float32)
        out_spec = pl.BlockSpec((tb, tl), lambda i, j: (i, j))
        dims = ("parallel", "parallel")

    out = pl.pallas_call(
        kernel,
        out_shape=out_shape,
        grid=grid,
        in_specs=in_specs,
        out_specs=out_spec,
        compiler_params=pltpu.CompilerParams(dimension_semantics=dims),
    )(x2, t2)

    if reduce_rows:
        total = jnp.sum(out)
        return total / N if size_average else total
    return out.reshape(B, C)


def _reference_loss(inp, target, margin=0.0, gamma_neg=4.0, gamma_pos=1.0,
                    clip=0.05, eps=1e-8, reduce=None, size_average=None):
    """Pure numpy reference mirroring the PyTorch forward exactly."""
    x = np.asarray(inp, np.float64)
    t = np.asarray(target, np.float64)
    pos = (t > margin).astype(np.float64)
    neg = (t < -margin).astype(np.float64)
    s = 1.0 / (1.0 + np.exp(-x))
    s_pos = s
    s_neg = 1.0 - s
    if clip is not None and clip > 0:
        s_neg = np.minimum(s_neg + clip, 1.0)
    loss_pos = pos * np.log(np.maximum(s_pos, eps))
    loss_neg = neg * np.log(np.maximum(s_neg, eps))
    loss = -(loss_pos + loss_neg)
    if gamma_neg > 0 or gamma_pos > 0:
        prob = s_pos * pos + s_neg * neg
        gamma = gamma_pos * pos + gamma_neg * neg
        loss = loss * np.power(1.0 - prob, gamma)
    if reduce:
        return loss.mean() if size_average else loss.sum()
    return loss


if __name__ == "__main__":
    key = jax.random.PRNGKey(0)

    # --- 1) main case: (48, 128), elementwise ------------------------------
    B, C = 48, 128
    k1, k2 = jax.random.split(key)
    x = jax.random.normal(k1, (B, C), dtype=jnp.float32)
    tgt = jax.random.randint(k2, (B, C), -1, 2).astype(jnp.float32)  # {-1,0,1}

    loss = jax.block_until_ready(asymmetric_loss(x, tgt))
    ref = _reference_loss(np.asarray(x), np.asarray(tgt))
    assert np.allclose(np.asarray(loss), ref, rtol=1e-4, atol=1e-5), \
        f"elementwise mismatch, max diff {np.max(np.abs(np.asarray(loss) - ref))}"

    # --- 2) fused reduce=True (mean) on the same inputs ---------------------
    loss_m = jax.block_until_ready(
        asymmetric_loss(x, tgt, reduce=True, size_average=True))
    ref_m = _reference_loss(np.asarray(x), np.asarray(tgt),
                            reduce=True, size_average=True)
    assert np.allclose(float(loss_m), ref_m, rtol=1e-4, atol=1e-5), \
        f"mean mismatch: {float(loss_m)} vs {ref_m}"

    # --- 3) C not a multiple of 128 -> lane-dense flatten path --------------
    B3, C3 = 16, 80
    k3, k4 = jax.random.split(k1)
    x3 = jax.random.normal(k3, (B3, C3), dtype=jnp.float32)
    t3 = jax.random.randint(k4, (B3, C3), -1, 2).astype(jnp.float32)
    loss3 = jax.block_until_ready(asymmetric_loss(x3, t3))
    ref3 = _reference_loss(np.asarray(x3), np.asarray(t3))
    assert np.allclose(np.asarray(loss3), ref3, rtol=1e-4, atol=1e-5), \
        "flattened-lane path mismatch"

    # --- 4) column-tiled ragged reduce (sum), exercises the in-kernel mask --
    B4, C4 = 8, 2304   # tl=2048 -> ragged last column block
    k5, k6 = jax.random.split(k2)
    x4 = jax.random.normal(k5, (B4, C4), dtype=jnp.float32)
    t4 = jax.random.randint(k6, (B4, C4), -1, 2).astype(jnp.float32)
    loss4 = jax.block_until_ready(asymmetric_loss(x4, t4, reduce=True))
    ref4 = _reference_loss(np.asarray(x4), np.asarray(t4), reduce=True)
    assert np.allclose(float(loss4), ref4, rtol=1e-4, atol=1e-3), \
        f"ragged reduce mismatch: {float(loss4)} vs {ref4}"

    # --- 5) native bf16 inputs stream straight into the kernel --------------
    loss_bf = jax.block_until_ready(
        asymmetric_loss(x.astype(jnp.bfloat16), tgt.astype(jnp.bfloat16)))
    assert np.max(np.abs(np.asarray(loss_bf) - ref)) < 0.25, "bf16 path mismatch"

    print("KERNEL_OK")
</pallas_src>

<mosaic_0001>
module attributes {stable_mosaic.version = 11 : i64} {
  func.func @_asl_kernel(%arg0: i32, %arg1: i32, %arg2: memref<24x128xf32, #tpu.memory_space<vmem>>, %arg3: memref<24x128xf32, #tpu.memory_space<vmem>>, %arg4: memref<24x128xf32, #tpu.memory_space<vmem>>) attributes {dimension_semantics = [#tpu.dimension_semantics<parallel>, #tpu.dimension_semantics<parallel>], iteration_bounds = array<i64: 2, 1>, scalar_prefetch = 0 : i64, scratch_operands = 0 : i64, tpu.core_type = #tpu.core_type<tc>, window_params = [{transform_indices = @transform_0, window_bounds = array<i64: 24, 128>}, {transform_indices = @transform_1, window_bounds = array<i64: 24, 128>}, {transform_indices = @transform_2, window_bounds = array<i64: 24, 128>}]} {
    %c0 = arith.constant 0 : index
    %c0_0 = arith.constant 0 : index
    %0 = vector.load %arg2[%c0, %c0_0] : memref<24x128xf32, #tpu.memory_space<vmem>>, vector<24x128xf32>
    %c0_1 = arith.constant 0 : index
    %c0_2 = arith.constant 0 : index
    %1 = vector.load %arg3[%c0_1, %c0_2] : memref<24x128xf32, #tpu.memory_space<vmem>>, vector<24x128xf32>
    %cst = arith.constant 0.000000e+00 : f32
    %2 = vector.broadcast %cst : f32 to vector<24x128xf32>
    %3 = arith.cmpf ogt, %1, %2 : vector<24x128xf32>
    %cst_3 = arith.constant -0.000000e+00 : f32
    %4 = vector.broadcast %cst_3 : f32 to vector<24x128xf32>
    %5 = arith.cmpf olt, %1, %4 : vector<24x128xf32>
    %cst_4 = arith.constant 0.000000e+00 : f32
    %6 = vector.broadcast %cst_4 : f32 to vector<24x128xf32>
    %7 = arith.subf %6, %0 : vector<24x128xf32>
    %8 = math.exp %7 : vector<24x128xf32>
    %cst_5 = arith.constant 1.000000e+00 : f32
    %9 = vector.broadcast %cst_5 : f32 to vector<24x128xf32>
    %10 = arith.addf %9, %8 : vector<24x128xf32>
    %cst_6 = arith.constant 1.000000e+00 : f32
    %11 = vector.broadcast %cst_6 : f32 to vector<24x128xf32>
    %12 = arith.divf %11, %10 : vector<24x128xf32>
    %cst_7 = arith.constant 1.000000e+00 : f32
    %13 = vector.broadcast %cst_7 : f32 to vector<24x128xf32>
    %14 = arith.subf %13, %12 : vector<24x128xf32>
    %cst_8 = arith.constant 5.000000e-02 : f32
    %15 = vector.broadcast %cst_8 : f32 to vector<24x128xf32>
    %16 = arith.addf %14, %15 : vector<24x128xf32>
    %cst_9 = arith.constant 1.000000e+00 : f32
    %17 = vector.broadcast %cst_9 : f32 to vector<24x128xf32>
    %18 = arith.minimumf %16, %17 : vector<24x128xf32>
    %cst_10 = arith.constant 1.000000e+00 : f32
    %19 = vector.broadcast %cst_10 : f32 to vector<24x128xf32>
    %20 = arith.select %5, %18, %19 : vector<24x128xi1>, vector<24x128xf32>
    %21 = arith.select %3, %12, %20 : vector<24x128xi1>, vector<24x128xf32>
    %cst_11 = arith.constant 9.99999993E-9 : f32
    %22 = vector.broadcast %cst_11 : f32 to vector<24x128xf32>
    %23 = arith.maximumf %21, %22 : vector<24x128xf32>
    %24 = math.log %23 : vector<24x128xf32>
    %cst_12 = arith.constant 0.000000e+00 : f32
    %25 = vector.broadcast %cst_12 : f32 to vector<24x128xf32>
    %26 = arith.subf %25, %24 : vector<24x128xf32>
    %cst_13 = arith.constant 1.000000e+00 : f32
    %27 = vector.broadcast %cst_13 : f32 to vector<24x128xf32>
    %28 = arith.subf %27, %12 : vector<24x128xf32>
    %cst_14 = arith.constant 1.000000e+00 : f32
    %29 = vector.broadcast %cst_14 : f32 to vector<24x128xf32>
    %30 = arith.subf %29, %18 : vector<24x128xf32>
    %31 = arith.mulf %30, %30 : vector<24x128xf32>
    %32 = arith.mulf %31, %31 : vector<24x128xf32>
    %cst_15 = arith.constant 1.000000e+00 : f32
    %33 = vector.broadcast %cst_15 : f32 to vector<24x128xf32>
    %34 = arith.select %5, %32, %33 : vector<24x128xi1>, vector<24x128xf32>
    %35 = arith.select %3, %28, %34 : vector<24x128xi1>, vector<24x128xf32>
    %36 = arith.mulf %26, %35 : vector<24x128xf32>
    %c0_16 = arith.constant 0 : index
    %c0_17 = arith.constant 0 : index
    %37 = vector.load %arg4[%c0_16, %c0_17] : memref<24x128xf32, #tpu.memory_space<vmem>>, vector<24x128xf32>
    tpu.vector_store %arg4[%c0_16, %c0_17], %36 {strides = array<i32>} : memref<24x128xf32, #tpu.memory_space<vmem>>, vector<24x128xf32>,
    return
  }
  func.func @transform_0(%arg0: i32, %arg1: i32) -> (i32, i32) {
    %c0_i32 = arith.constant 0 : i32
    return %arg0, %arg1 : i32, i32
  }
  func.func @transform_1(%arg0: i32, %arg1: i32) -> (i32, i32) {
    %c0_i32 = arith.constant 0 : i32
    return %arg0, %arg1 : i32, i32
  }
  func.func @transform_2(%arg0: i32, %arg1: i32) -> (i32, i32) {
    %c0_i32 = arith.constant 0 : i32
    return %arg0, %arg1 : i32, i32
  }
}

</mosaic_0001>

<llo_original>
// kernel: tpu_custom_call.1
$region0: #{tpu_custom_call.1}
  #allocation0 [shape = 'u32[]', space=smem, size = 0x4, offset = 0x4, fixed_abs, tag = 'smem constant byte address 0x4 - core index']
  #allocation1 [shape = 'u32[144,128]{1,0:T(1,128)}', space=vmem, size = 0x12000, scoped, tag = 'internal scratch']
  %s0 = inlined_call_operand.hbm [shape: f32[48,128], index: 0, kind: input, shape index: {}]
  %s1 = inlined_call_operand.hbm [shape: f32[48,128], index: 1, kind: input, shape index: {}]
  %s2 = inlined_call_operand.hbm [shape: f32[48,128], index: 2, kind: output, shape index: {}]
  %s3 = sld [smem:[#allocation0]]
  $region49: #{tpu_custom_call.1} parent=0
    _
  %s5 = ssub.s32 1, %s3
  %s6 = scalar_select 0, %s5, %s3
  $region1: #{tpu_custom_call.1} parent=0
    #allocation2 [shape = 'u8[24576]{0}', space=vmem, size = 0x6000, scoped, tag = 'input window, operand 0']
    #allocation3 [shape = 's32[2]{0}', space=sflag, size = 0x8, scoped, tag = 'scoped memory for tpu_custom_call.1']
    #allocation4 [shape = 's32[2]{0}', space=sflag, size = 0x8, scoped, tag = 'scoped memory for tpu_custom_call.1']
    #allocation5 [shape = 'u8[24576]{0}', space=vmem, size = 0x6000, scoped, tag = 'input window, operand 1']
    #allocation6 [shape = 's32[2]{0}', space=sflag, size = 0x8, scoped, tag = 'scoped memory for tpu_custom_call.1']
    #allocation7 [shape = 'u8[24576]{0}', space=vmem, size = 0x6000, scoped, tag = 'output window, operand 0']
    %7 = vsyncpa [#allocation3], 0
    %s8 = scalar_lea.sflag [#allocation3], 1
    %9 = vsyncpa %s8, 0
    %10 = vsyncpa [#allocation6], 0
    %s11 = scalar_lea.sflag [#allocation6], 1
    %12 = vsyncpa %s11, 0
    %13 = vsyncpa [#allocation4], 0
    %s14 = scalar_lea.sflag [#allocation4], 1
    %15 = vsyncpa %s14, 0
    loop: start=0, step=1, limit=4
    $region2: #{tpu_custom_call.1} parent=1 // loop_pre_header
      _
    $region3: #{tpu_custom_call.1} parent=1 // loop_header
      %s17 = sphi 0, %s21
      %p18 = scmp.ge.s32.totalorder %s17, 4
      %s24 = sphi 0, %s36
      %s25 = sphi 0, %s32
      %s26 = sphi 0, %s24
      %s27 = sphi 0, %s25
      %s28 = sphi 0, %s26
      %s29 = sphi 0, %s27
      %s41 = sphi 0, %s43
      %s44 = sphi 0, %s41
      %s45 = sphi 0, %s44
      %s61 = sphi 0, %s45
      %s69 = sphi 0, %s71
      %s72 = sphi 0, %s69
      %s73 = sphi 0, %s72
      %s89 = sphi 0, %s73
      %s97 = sphi 0, %s99
      %s100 = sphi 0, %s97
      %s101 = sphi 0, %s100
      %s117 = sphi 0, %s101
    $region4: #{tpu_custom_call.1} parent=1 // loop_header_branch
      %20 = sbr.rel (%p18) target = $region8
    $region5: #{tpu_custom_call.1} parent=1 // loop_body
      %s22 = ssub.s32 %s17, 1
      %s23 = ssub.s32 %s17, 2
      %s30 = sadd.s32 1, %s25
      %p31 = scmp.ge.s32.totalorder %s30, 1
      %s32 = scalar_select %p31, 0, %s30
      %s33 = sadd.s32 1, %s24
      %s34 = scalar_select %p31, %s33, %s24
      %p35 = scmp.ge.s32.totalorder %s34, 2
      %s36 = scalar_select %p35, 0, %s34
      %s37 = ssub.s32 %s24, %s36
      %s38 = ssub.s32 %s25, %s32
      %s39 = sor.u32 %s37, %s38
      %p40 = scmp.eq.s32.totalorder %s39, 0
      %s42 = sadd.s32 %s41, 1
      %s43 = scalar_select %p40, %s41, %s42
      %p46 = pneg %p40
      %p47 = scmp.eq.s32.totalorder %s17, 1
      %p48 = por %p46, %p47
      %p49 = scmp.ne.s32.totalorder %s41, %s44
      %p50 = scmp.eq.s32.totalorder %s17, 0
      %p51 = por %p49, %p50
      %p52 = scmp.ne.s32.totalorder %s41, %s44
      %p53 = scmp.eq.s32.totalorder %s22, 1
      %p54 = por %p52, %p53
      %p55 = scmp.ne.s32.totalorder %s44, %s45
      %p56 = scmp.eq.s32.totalorder %s22, 0
      %p57 = por %p55, %p56
      %p58 = scmp.ne.s32.totalorder %s44, %s45
      %p59 = scmp.eq.s32.totalorder %s23, 1
      %p60 = por %p58, %p59
      %p62 = scmp.ne.s32.totalorder %s45, %s61
      %p63 = scmp.eq.s32.totalorder %s23, 0
      %p64 = por %p62, %p63
      %s65 = ssub.s32 %s24, %s36
      %s66 = ssub.s32 %s25, %s32
      %s67 = sor.u32 %s65, %s66
      %p68 = scmp.eq.s32.totalorder %s67, 0
      %s70 = sadd.s32 %s69, 1
      %s71 = scalar_select %p68, %s69, %s70
      %p74 = pneg %p68
      %p75 = scmp.eq.s32.totalorder %s17, 1
      %p76 = por %p74, %p75
      %p77 = scmp.ne.s32.totalorder %s69, %s72
      %p78 = scmp.eq.s32.totalorder %s17, 0
      %p79 = por %p77, %p78
      %p80 = scmp.ne.s32.totalorder %s69, %s72
      %p81 = scmp.eq.s32.totalorder %s22, 1
      %p82 = por %p80, %p81
      %p83 = scmp.ne.s32.totalorder %s72, %s73
      %p84 = scmp.eq.s32.totalorder %s22, 0
      %p85 = por %p83, %p84
      %p86 = scmp.ne.s32.totalorder %s72, %s73
      %p87 = scmp.eq.s32.totalorder %s23, 1
      %p88 = por %p86, %p87
      %p90 = scmp.ne.s32.totalorder %s73, %s89
      %p91 = scmp.eq.s32.totalorder %s23, 0
      %p92 = por %p90, %p91
      %s93 = ssub.s32 %s24, %s36
      %s94 = ssub.s32 %s25, %s32
      %s95 = sor.u32 %s93, %s94
      %p96 = scmp.eq.s32.totalorder %s95, 0
      %s98 = sadd.s32 %s97, 1
      %s99 = scalar_select %p96, %s97, %s98
      %p102 = pneg %p96
      %p103 = scmp.eq.s32.totalorder %s17, 1
      %p104 = por %p102, %p103
      %p105 = scmp.ne.s32.totalorder %s97, %s100
      %p106 = scmp.eq.s32.totalorder %s17, 0
      %p107 = por %p105, %p106
      %p108 = scmp.ne.s32.totalorder %s97, %s100
      %p109 = scmp.eq.s32.totalorder %s22, 1
      %p110 = por %p108, %p109
      %p111 = scmp.ne.s32.totalorder %s100, %s101
      %p112 = scmp.eq.s32.totalorder %s22, 0
      %p113 = por %p111, %p112
      %p114 = scmp.ne.s32.totalorder %s100, %s101
      %p115 = scmp.eq.s32.totalorder %s23, 1
      %p116 = por %p114, %p115
      %p118 = scmp.ne.s32.totalorder %s101, %s117
      %p119 = scmp.eq.s32.totalorder %s23, 0
      %p120 = por %p118, %p119
      %p121 = scmp.le.s32.totalorder 1, %s17
      %p122 = scmp.lt.s32.totalorder %s17, 3
      %p123 = pnand %p121, %p122
      %p124 = pneg %p123
      // Predicated region
      $region9: #{tpu_custom_call.1} parent=5 // pred_check
        _
      $region10: #{tpu_custom_call.1} parent=5 // pred_check_branch
        %126 = sbr.rel (%p123) target = $region12
      $region11: #{tpu_custom_call.1} parent=5 // pred_region
        %s127 = ssub.s32 %s17, 1
      $region12: #{tpu_custom_call.1} parent=5 // pred_fallthru
        _
      %p128 = scmp.lt.s32.totalorder %s17, 2
      // Predicated region
      $region13: #{tpu_custom_call.1} parent=5 // pred_check
        %p129 = pneg %p128
      $region14: #{tpu_custom_call.1} parent=5 // pred_check_branch
        %131 = sbr.rel (%p129) target = $region16
      $region15: #{tpu_custom_call.1} parent=5 // pred_region
        // Predicated region
        $region17: #{tpu_custom_call.1} parent=15 // pred_check
          %p132 = pneg %p51
        $region18: #{tpu_custom_call.1} parent=15 // pred_check_branch
          %134 = sbr.rel (%p132) target = $region20
        $region19: #{tpu_custom_call.1} parent=15 // pred_region
          %s135 = sand.u32 %s41, 1
          %s136 = scalar_lea.sflag [#allocation3], %s135
          %s137 = sand.u32 %s41, 1
          %s138 = smul.addr %s137, 24
          %s139 = scalar_lea.vmem [#allocation2], %s138
          %s140 = smul.u32 3, %s24
          %s142 = ssub.s32 384, 384
          %143 = vsyncadd %s136, %s142
          %s144 = sadd.s32 %s25, %s140
          %s145 = smul.addr %s144, 128
          %s146 = scalar_lea.hbm %s0, %s145
          %s147 = sshll.u32 %s139, 4
          %s148 = int_to_ptr.vmem [resolvable:$true] %s147
          %153 = dma.hbm_to_vmem [thread:$0]  %s146, 384, %s148, %s136, 128, 128, 8
        $region20: #{tpu_custom_call.1} parent=15 // pred_fallthru
          _
        // Predicated region
        $region21: #{tpu_custom_call.1} parent=15 // pred_check
          %p154 = pneg %p79
        $region22: #{tpu_custom_call.1} parent=15 // pred_check_branch
          %156 = sbr.rel (%p154) target = $region24
        $region23: #{tpu_custom_call.1} parent=15 // pred_region
          %s157 = sand.u32 %s69, 1
          %s158 = scalar_lea.sflag [#allocation6], %s157
          %s159 = sand.u32 %s69, 1
          %s160 = smul.addr %s159, 24
          %s161 = scalar_lea.vmem [#allocation5], %s160
          %s162 = smul.u32 3, %s24
          %s164 = ssub.s32 384, 384
          %165 = vsyncadd %s158, %s164
          %s166 = sadd.s32 %s25, %s162
          %s167 = smul.addr %s166, 128
          %s168 = scalar_lea.hbm %s1, %s167
          %s169 = sshll.u32 %s161, 4
          %s170 = int_to_ptr.vmem [resolvable:$true] %s169
          %175 = dma.hbm_to_vmem [thread:$0]  %s168, 384, %s170, %s158, 128, 128, 8
        $region24: #{tpu_custom_call.1} parent=15 // pred_fallthru
          _
      $region16: #{tpu_custom_call.1} parent=5 // pred_fallthru
        _
      %p176 = scmp.le.s32.totalorder 1, %s17
      %p177 = scmp.lt.s32.totalorder %s17, 3
      %p178 = pnand %p176, %p177
      %p179 = pneg %p178
      // Predicated region
      $region25: #{tpu_custom_call.1} parent=5 // pred_check
        _
      $region26: #{tpu_custom_call.1} parent=5 // pred_check_branch
        %181 = sbr.rel (%p178) target = $region28
      $region27: #{tpu_custom_call.1} parent=5 // pred_region
        %s182 = ssub.s32 %s17, 1
        %s183 = sand.u32 %s44, 1
        %s184 = scalar_lea.sflag [#allocation3], %s183
        %s185 = sand.u32 %s44, 1
        %s186 = smul.addr %s185, 24
        %s187 = scalar_lea.vmem [#allocation2], %s186
        // Predicated region
        $region29: #{tpu_custom_call.1} parent=27 // pred_check
          %p188 = pneg %p57
        $region30: #{tpu_custom_call.1} parent=27 // pred_check_branch
          %190 = sbr.rel (%p188) target = $region32
        $region31: #{tpu_custom_call.1} parent=27 // pred_region
          %191 = dma.done %s184, 384
        $region32: #{tpu_custom_call.1} parent=27 // pred_fallthru
          _
        %s192 = sand.u32 %s72, 1
        %s193 = scalar_lea.sflag [#allocation6], %s192
        %s194 = sand.u32 %s72, 1
        %s195 = smul.addr %s194, 24
        %s196 = scalar_lea.vmem [#allocation5], %s195
        // Predicated region
        $region33: #{tpu_custom_call.1} parent=27 // pred_check
          %p197 = pneg %p85
        $region34: #{tpu_custom_call.1} parent=27 // pred_check_branch
          %199 = sbr.rel (%p197) target = $region36
        $region35: #{tpu_custom_call.1} parent=27 // pred_region
          %200 = dma.done %s193, 384
        $region36: #{tpu_custom_call.1} parent=27 // pred_fallthru
          _
        %s201 = sand.u32 %s44, 1
        %s202 = scalar_lea.sflag [#allocation3], %s201
        %s203 = sand.u32 %s44, 1
        %s204 = smul.addr %s203, 24
        %s205 = scalar_lea.vmem [#allocation2], %s204
        %p206 = pneg %p57
        %p207 = pneg %p54
        %s208 = sand.u32 %s72, 1
        %s209 = scalar_lea.sflag [#allocation6], %s208
        %s210 = sand.u32 %s72, 1
        %s211 = smul.addr %s210, 24
        %s212 = scalar_lea.vmem [#allocation5], %s211
        %p213 = pneg %p85
        %p214 = pneg %p82
        %p215 = pneg %p113
        %p216 = pneg %p110
        %s217 = sand.u32 %s100, 1
        %s218 = scalar_lea.sflag [#allocation4], %s217
        %s219 = sand.u32 %s100, 1
        %s220 = smul.addr %s219, 24
        %s221 = scalar_lea.vmem [#allocation7], %s220
        %s222 = smul.u32 3, %s26
        %s223 = smul.u32 3, %s26
        %s224 = smul.u32 3, %s26
        %v225 = vld [vmem:[%s187] sm:$0xff]
        %v226 = vld [vmem:[%s187 + $0x8] sm:$0xff]
        %v227 = vld [vmem:[%s187 + $0x10] sm:$0xff]
        %v228 = vld [vmem:[%s196] sm:$0xff]
        %v229 = vld [vmem:[%s196 + $0x8] sm:$0xff]
        %v230 = vld [vmem:[%s196 + $0x10] sm:$0xff]
        %vm231 = vcmp.gt.f32.partialorder %v228, 0.0
        %vm232 = vcmp.gt.f32.partialorder %v229, 0.0
        %vm233 = vcmp.gt.f32.partialorder %v230, 0.0
        %vm234 = vcmp.lt.f32.partialorder %v228, -0.0
        %vm235 = vcmp.lt.f32.partialorder %v229, -0.0
        %vm236 = vcmp.lt.f32.partialorder %v230, -0.0
        %v237 = vsub.f32 0.0, %v225
        %v238 = vsub.f32 0.0, %v226
        %v239 = vsub.f32 0.0, %v227
        %v240 = vmul.f32 %v237, 1.442695
        %v241 = vpow.pop %v240
        %v242 = vmul.f32 %v238, 1.442695
        %v243 = vpow.pop %v242
        %v244 = vmul.f32 %v239, 1.442695
        %v245 = vpow.pop %v244
        %v246 = vadd.f32 %v241, 1.0
        %v247 = vadd.f32 %v243, 1.0
        %v248 = vadd.f32 %v245, 1.0
        %v249 = vrcp.pop %v246
        %v250 = vmul.f32 1.0, %v249
        %v251 = vrcp.pop %v247
        %v252 = vmul.f32 1.0, %v251
        %v253 = vrcp.pop %v248
        %v254 = vmul.f32 1.0, %v253
        %v255 = vsub.f32 1.0, %v250
        %v256 = vsub.f32 1.0, %v252
        %v257 = vsub.f32 1.0, %v254
        %v258 = vadd.f32 %v255, 0.05
        %v259 = vadd.f32 %v256, 0.05
        %v260 = vadd.f32 %v257, 0.05
        %v261 = vmin.f32 %v258, 1.0
        %v262 = vmin.f32 %v259, 1.0
        %v263 = vmin.f32 %v260, 1.0
        %v264 = vsel %vm234, %v261, 1.0
        %v265 = vsel %vm235, %v262, 1.0
        %v266 = vsel %vm236, %v263, 1.0
        %v267 = vsel %vm231, %v250, %v264
        %v268 = vsel %vm232, %v252, %v265
        %v269 = vsel %vm233, %v254, %v266
        %v270 = vmax.f32 %v267, 1e-08
        %v271 = vmax.f32 %v268, 1e-08
        %v272 = vmax.f32 %v269, 1e-08
        %v273 = vlog2.pop %v270
        %v274 = vmul.f32 %v273, 0.6931472
        %v275 = vlog2.pop %v271
        %v276 = vmul.f32 %v275, 0.6931472
        %v277 = vlog2.pop %v272
        %v278 = vmul.f32 %v277, 0.6931472
        %v279 = vsub.f32 0.0, %v274
        %v280 = vsub.f32 0.0, %v276
        %v281 = vsub.f32 0.0, %v278
        %v282 = vsub.f32 1.0, %v261
        %v283 = vsub.f32 1.0, %v262
        %v284 = vsub.f32 1.0, %v263
        %v285 = vmul.f32 %v282, %v282
        %v286 = vmul.f32 %v283, %v283
        %v287 = vmul.f32 %v284, %v284
        %v288 = vmul.f32 %v285, %v285
        %v289 = vmul.f32 %v286, %v286
        %v290 = vmul.f32 %v287, %v287
        %v291 = vsel %vm234, %v288, 1.0
        %v292 = vsel %vm235, %v289, 1.0
        %v293 = vsel %vm236, %v290, 1.0
        %v294 = vsel %vm231, %v255, %v291
        %v295 = vsel %vm232, %v256, %v292
        %v296 = vsel %vm233, %v257, %v293
        %v297 = vmul.f32 %v279, %v294
        %v298 = vmul.f32 %v280, %v295
        %v299 = vmul.f32 %v281, %v296
        %300 = vst [vmem:[%s221] sm:$0xff] %v297
        %301 = vst [vmem:[%s221 + $0x8] sm:$0xff] %v298
        %302 = vst [vmem:[%s221 + $0x10] sm:$0xff] %v299
        %s303 = sand.u32 %s100, 1
        %s304 = scalar_lea.sflag [#allocation4], %s303
        %s305 = sand.u32 %s100, 1
        %s306 = smul.addr %s305, 24
        %s307 = scalar_lea.vmem [#allocation7], %s306
        // Predicated region
        $region37: #{tpu_custom_call.1} parent=27 // pred_check
          %p308 = pneg %p110
        $region38: #{tpu_custom_call.1} parent=27 // pred_check_branch
          %310 = sbr.rel (%p308) target = $region40
        $region39: #{tpu_custom_call.1} parent=27 // pred_region
          %s311 = smul.u32 3, %s26
          %s313 = ssub.s32 384, 384
          %314 = vsyncadd %s304, %s313
          %s315 = sadd.s32 %s27, %s311
          %s316 = smul.addr %s315, 128
          %s317 = scalar_lea.hbm %s2, %s316
          %s318 = sshll.u32 %s307, 4
          %s319 = int_to_ptr.vmem [resolvable:$true] %s318
          %324 = dma.vmem_to_hbm [thread:$0]  %s319, 384, %s317, %s304, 128, 128, 8
        $region40: #{tpu_custom_call.1} parent=27 // pred_fallthru
          _
      $region28: #{tpu_custom_call.1} parent=5 // pred_fallthru
        _
      %p325 = scmp.le.s32.totalorder 2, %s17
      // Predicated region
      $region41: #{tpu_custom_call.1} parent=5 // pred_check
        %p326 = pneg %p325
      $region42: #{tpu_custom_call.1} parent=5 // pred_check_branch
        %328 = sbr.rel (%p326) target = $region44
      $region43: #{tpu_custom_call.1} parent=5 // pred_region
        %s329 = ssub.s32 %s17, 2
        // Predicated region
        $region45: #{tpu_custom_call.1} parent=43 // pred_check
          %p330 = pneg %p116
        $region46: #{tpu_custom_call.1} parent=43 // pred_check_branch
          %332 = sbr.rel (%p330) target = $region48
        $region47: #{tpu_custom_call.1} parent=43 // pred_region
          %s333 = sand.u32 %s101, 1
          %s334 = scalar_lea.sflag [#allocation4], %s333
          %s335 = sand.u32 %s101, 1
          %s336 = smul.addr %s335, 24
          %s337 = scalar_lea.vmem [#allocation7], %s336
          %338 = dma.done %s334, 384
        $region48: #{tpu_custom_call.1} parent=43 // pred_fallthru
          _
      $region44: #{tpu_custom_call.1} parent=5 // pred_fallthru
        _
    $region6: #{tpu_custom_call.1} parent=1 // loop_footer
      %s21 = sadd.s32 1, %s17
    $region7: #{tpu_custom_call.1} parent=1 // loop_footer_branch
      %16 = sbr.rel target = $region3
    $region8: #{tpu_custom_call.1} parent=1 // loop_exit
      _
    %339 = vsyncpa [#allocation3], 1
    %s340 = scalar_lea.sflag [#allocation3], 1
    %341 = vsyncpa %s340, 1
    %342 = vsyncpa [#allocation6], 1
    %s343 = scalar_lea.sflag [#allocation6], 1
    %344 = vsyncpa %s343, 1
    %345 = vsyncpa [#allocation4], 1
    %s346 = scalar_lea.sflag [#allocation4], 1
    %347 = vsyncpa %s346, 1

</llo_original>
